<compile_context>
chip_gen: v7x
topology: tpu7x:2x2x1
jax: 0.10.0
libtpu: 0.0.40
codegen_flags: <defaults>
</compile_context>

<pallas_src>
import jax
import jax.numpy as jnp
import numpy as np
from jax.experimental import pallas as pl
from jax.experimental.pallas import tpu as pltpu

BN_EPS = 1e-5
LANE = 128


# ----------------------------------------------------------------------------
# Small helpers
# ----------------------------------------------------------------------------
def _round_up(v, m):
    return ((v + m - 1) // m) * m


def _largest_divisor(n, cap, multiple=1):
    cap = max(1, min(n, cap))
    for d in range(cap, 0, -1):
        if n % d == 0 and d % multiple == 0:
            return d
    return 1


def _vmem_caps():
    """(tile-selection budget, vmem_limit cap) in bytes, per generation."""
    phys = 64 * 1024 * 1024  # conservative (v7x) if the query fails
    try:
        phys = int(pltpu.get_tpu_info().vmem_capacity_bytes)
    except Exception:
        pass
    return int(phys * 0.55), int(phys * 0.75)


def fold_bn(gamma, beta, mean, var):
    scale = gamma / jnp.sqrt(var + BN_EPS)
    bias = beta - mean * scale
    return scale, bias


def w_to_mat(w_oihw):
    # (Cout, Cin, kh, kw) -> (kh*kw*Cin, Cout), matching tap/im2col ordering
    cout = w_oihw.shape[0]
    return jnp.transpose(w_oihw, (2, 3, 1, 0)).reshape(-1, cout)


# ----------------------------------------------------------------------------
# Implicit-GEMM kernel: stride-1 KxK conv + BN (+ fused shortcut) + ReLU
# ----------------------------------------------------------------------------
def _make_implicit_kernel(n_taps, cin, tm, taps, apply_relu, mode):
    def kernel(*refs):
        if mode == "proj":
            x_ref, w_ref, b_ref, xs_ref, ws_ref, o_ref, acc_ref = refs
        elif mode == "identity":
            x_ref, w_ref, b_ref, r_ref, o_ref, acc_ref = refs
        else:
            x_ref, w_ref, b_ref, o_ref, acc_ref = refs

        base = pl.multiple_of(pl.program_id(1) * tm, 8)
        # Static tap loop over the VMEM-resident per-sample frame; first tap
        # assigns (no zero-fill), later taps accumulate in f32.
        for t in range(n_taps):
            patch = x_ref[pl.ds(base + taps[t], tm), :]          # (tm, Cin) bf16
            w_tap = w_ref[pl.ds(t * cin, cin), :]                 # (Cin, Cout_p)
            contrib = jnp.dot(patch, w_tap, preferred_element_type=jnp.float32)
            if t == 0:
                acc_ref[...] = contrib
            else:
                acc_ref[...] += contrib

        y = acc_ref[...] + b_ref[...]
        if mode == "proj":
            y = y + jnp.dot(xs_ref[...], ws_ref[...],
                            preferred_element_type=jnp.float32)
        elif mode == "identity":
            y = y + r_ref[...].astype(jnp.float32)
        if apply_relu:
            y = jnp.maximum(y, 0.0)
        o_ref[...] = y.astype(o_ref.dtype)

    return kernel


def implicit_conv_stage(x_act, w_mat, scale, bias, k, *, apply_relu, out_dtype,
                        shortcut=None):
    """Fused stride-1 'same' KxK conv + folded BN (+shortcut add) (+ReLU).

    x_act:   (N, H, W, Cin)   activation (cast to bf16 internally)
    w_mat:   (k*k*Cin, Cout)  conv weights in tap-major layout
    shortcut: None
              | ("identity", res_nhwc)                      res: (N,H,W,Cout)
              | ("proj", xs_nhwc, ws_mat, s_scale, s_bias)  xs: (N,H,W,Cs)
    Returns (N, H, W, Cout) in out_dtype.
    """
    N, H, W, Cin = x_act.shape
    K, Cout = w_mat.shape
    assert K == k * k * Cin and k % 2 == 1
    p = k // 2
    Cout_p = _round_up(Cout, LANE)
    Wf = _round_up(W + 2 * p, 8)        # frame row width (lane/sublane friendly)
    Hf = H + 2 * p + 1                  # +1 zero row: flat tap over-reads stay in bounds

    # Zero-padded, W-aligned, flattened per-sample input frame (bf16).
    xf = jnp.pad(x_act.astype(jnp.bfloat16),
                 ((0, 0), (p, p + 1), (p, Wf - W - p), (0, 0)))
    xf = xf.reshape(N, Hf * Wf, Cin)

    # BN scale folded into the weights; bias kept separate (f32, lane-dense).
    w_f = (w_mat.astype(jnp.float32) * scale[None, :]).astype(jnp.bfloat16)
    b_f = bias.astype(jnp.float32).reshape(1, Cout)
    if Cout_p != Cout:
        w_f = jnp.pad(w_f, ((0, 0), (0, Cout_p - Cout)))
        b_f = jnp.pad(b_f, ((0, 0), (0, Cout_p - Cout)))

    # Shortcut streams (bf16; projection weight/bias folded with its BN).
    mode = "none"
    res_f = xs_f = ws_f = None
    Cs = 0
    if shortcut is not None and shortcut[0] == "identity":
        mode = "identity"
        res = shortcut[1]
        res_f = jnp.pad(res.astype(jnp.bfloat16),
                        ((0, 0), (0, 0), (0, Wf - W), (0, Cout_p - res.shape[-1])))
        res_f = res_f.reshape(N, H * Wf, Cout_p)
    elif shortcut is not None and shortcut[0] == "proj":
        mode = "proj"
        xs, ws_mat, s_scale, s_bias = shortcut[1], shortcut[2], shortcut[3], shortcut[4]
        Cs = xs.shape[-1]
        xs_f = jnp.pad(xs.astype(jnp.bfloat16),
                       ((0, 0), (0, 0), (0, Wf - W), (0, 0))).reshape(N, H * Wf, Cs)
        ws_f = (ws_mat.astype(jnp.float32) * s_scale[None, :]).astype(jnp.bfloat16)
        bs_f = s_bias.astype(jnp.float32).reshape(1, Cout)
        if Cout_p != Cout:
            ws_f = jnp.pad(ws_f, ((0, 0), (0, Cout_p - Cout)))
            bs_f = jnp.pad(bs_f, ((0, 0), (0, Cout_p - Cout)))
        b_f = b_f + bs_f                 # fold the shortcut-BN bias into the main bias

    # VMEM-budget-driven row tiling (th output rows per grid step).
    out_isize = jnp.dtype(out_dtype).itemsize
    tile_budget, limit_cap = _vmem_caps()
    fixed = 2 * Hf * Wf * Cin * 2 + 2 * K * Cout_p * 2 + 4 * Cout_p * 4
    per_row = 2 * Cout_p * out_isize + 4 * Cout_p * 4   # out (x2 bufs) + acc/temps
    if mode == "identity":
        per_row += 2 * Cout_p * 2
    elif mode == "proj":
        per_row += 2 * Cs * 2
        fixed += 2 * Cs * Cout_p * 2
    max_rows = min(2048, max(8, (2 << 20) // (Cout_p * 4)))   # keep f32 acc <= 2 MiB
    avail = tile_budget - fixed
    if avail > 0:
        max_rows = min(max_rows, max(avail // per_row, Wf))
    th = _largest_divisor(H, max(1, max_rows // Wf))
    tm = th * Wf
    nh = H // th

    need = fixed + tm * per_row
    vmem_limit = int(min(max(need + (8 << 20), 32 << 20), limit_cap))

    taps = tuple(ti * Wf + tj for ti in range(k) for tj in range(k))
    kernel = _make_implicit_kernel(k * k, Cin, tm, taps, apply_relu, mode)

    in_specs = [
        pl.BlockSpec((None, Hf * Wf, Cin), lambda n, i: (n, 0, 0)),   # resident frame
        pl.BlockSpec((K, Cout_p), lambda n, i: (0, 0)),               # resident weights
        pl.BlockSpec((1, Cout_p), lambda n, i: (0, 0)),               # bias
    ]
    args = [xf, w_f, b_f]
    if mode == "identity":
        in_specs.append(pl.BlockSpec((None, tm, Cout_p), lambda n, i: (n, i, 0)))
        args.append(res_f)
    elif mode == "proj":
        in_specs += [
            pl.BlockSpec((None, tm, Cs), lambda n, i: (n, i, 0)),
            pl.BlockSpec((Cs, Cout_p), lambda n, i: (0, 0)),
        ]
        args += [xs_f, ws_f]

    out_frame = pl.pallas_call(
        kernel,
        out_shape=jax.ShapeDtypeStruct((N, H * Wf, Cout_p), out_dtype),
        grid_spec=pltpu.PrefetchScalarGridSpec(
            num_scalar_prefetch=0,
            grid=(N, nh),
            in_specs=in_specs,
            out_specs=pl.BlockSpec((None, tm, Cout_p), lambda n, i: (n, i, 0)),
            scratch_shapes=[pltpu.VMEM((tm, Cout_p), jnp.float32)],
        ),
        compiler_params=pltpu.CompilerParams(
            dimension_semantics=("parallel", "arbitrary"),
            vmem_limit_bytes=vmem_limit,
        ),
    )(*args)

    out = out_frame.reshape(N, H, Wf, Cout_p)
    if Wf != W or Cout_p != Cout:
        out = out[:, :, :W, :Cout]
    return out


# ----------------------------------------------------------------------------
# Fallback GEMM kernel (stride>1 conv1 via im2col): single K block,
# weights resident, no scratch, direct store.
# ----------------------------------------------------------------------------
def _make_gemm_kernel(apply_relu):
    def kernel(p_ref, w_ref, b_ref, o_ref):
        y = jnp.dot(p_ref[...], w_ref[...], preferred_element_type=jnp.float32)
        y = y + b_ref[...]
        if apply_relu:
            y = jnp.maximum(y, 0.0)
        o_ref[...] = y.astype(o_ref.dtype)
    return kernel


def gemm_stage(patches, w_mat, scale, bias, *, apply_relu, out_dtype):
    M, K = patches.shape
    Cout = w_mat.shape[1]
    Cout_p = _round_up(Cout, LANE)

    w_f = (w_mat.astype(jnp.float32) * scale[None, :]).astype(jnp.bfloat16)
    b_f = bias.astype(jnp.float32).reshape(1, Cout)
    if Cout_p != Cout:
        w_f = jnp.pad(w_f, ((0, 0), (0, Cout_p - Cout)))
        b_f = jnp.pad(b_f, ((0, 0), (0, Cout_p - Cout)))

    patches = patches.astype(jnp.bfloat16)
    Mp = _round_up(M, 16)                 # bf16 packs 16 rows per vreg
    if Mp != M:
        patches = jnp.pad(patches, ((0, Mp - M), (0, 0)))

    out_isize = jnp.dtype(out_dtype).itemsize
    tile_budget, limit_cap = _vmem_caps()
    fixed = 2 * K * Cout_p * 2 + 4 * Cout_p * 4
    per_row = 2 * K * 2 + 2 * Cout_p * out_isize + 4 * Cout_p * 4
    max_rows = min(1024, max(8, (2 << 20) // (Cout_p * 4)))
    avail = tile_budget - fixed
    if avail > 0:
        max_rows = min(max_rows, max(avail // per_row, 8))
    max_rows = max(8, max_rows)
    tile_m = _largest_divisor(Mp, max_rows, multiple=8)

    need = fixed + tile_m * per_row
    vmem_limit = int(min(max(need + (8 << 20), 32 << 20), limit_cap))

    out = pl.pallas_call(
        _make_gemm_kernel(apply_relu),
        out_shape=jax.ShapeDtypeStruct((Mp, Cout_p), out_dtype),
        grid_spec=pltpu.PrefetchScalarGridSpec(
            num_scalar_prefetch=0,
            grid=(Mp // tile_m,),
            in_specs=[
                pl.BlockSpec((tile_m, K), lambda i: (i, 0)),
                pl.BlockSpec((K, Cout_p), lambda i: (0, 0)),
                pl.BlockSpec((1, Cout_p), lambda i: (0, 0)),
            ],
            out_specs=pl.BlockSpec((tile_m, Cout_p), lambda i: (i, 0)),
        ),
        compiler_params=pltpu.CompilerParams(
            dimension_semantics=("parallel",),
            vmem_limit_bytes=vmem_limit,
        ),
    )(patches, w_f, b_f)
    if Mp != M or Cout_p != Cout:
        out = out[:M, :Cout]
    return out


def im2col(x_nhwc, k, stride, pad):
    N, H, W, C = x_nhwc.shape
    xp = jnp.pad(x_nhwc, ((0, 0), (pad, pad), (pad, pad), (0, 0)))
    Ho = (H + 2 * pad - k) // stride + 1
    Wo = (W + 2 * pad - k) // stride + 1
    cols = []
    for i in range(k):
        for j in range(k):
            sl = xp[:, i::stride, j::stride, :][:, :Ho, :Wo, :]
            cols.append(sl)
    patches = jnp.stack(cols, axis=3)  # (N, Ho, Wo, k*k, C)
    return patches.reshape(N * Ho * Wo, k * k * C), Ho, Wo


# ----------------------------------------------------------------------------
# BasicBlock forward (Pallas)
# ----------------------------------------------------------------------------
def basic_block_pallas(x_nchw, params, k, stride):
    x = jnp.transpose(x_nchw, (0, 2, 3, 1)).astype(jnp.float32)   # NHWC
    N, H, W, Cin = x.shape
    Cout = params["w1"].shape[0]
    p = k // 2
    Ho = (H + 2 * p - k) // stride + 1
    Wo = (W + 2 * p - k) // stride + 1
    x_bf = x.astype(jnp.bfloat16)

    # conv1 + bn1 + relu
    s1, b1 = fold_bn(*params["bn1"])
    w1m = w_to_mat(params["w1"])
    if stride == 1:
        y1 = implicit_conv_stage(x_bf, w1m, s1, b1, k,
                                 apply_relu=True, out_dtype=jnp.bfloat16)
    else:
        # TODO(synk): strided conv1 still uses an HBM-materialized im2col.
        patches1, Ho, Wo = im2col(x_bf, k, stride, p)
        y1 = gemm_stage(patches1, w1m, s1, b1, apply_relu=True,
                        out_dtype=jnp.bfloat16).reshape(N, Ho, Wo, Cout)

    # conv2 + bn2 + shortcut add + relu, fully fused in one implicit-GEMM kernel
    s2, b2 = fold_bn(*params["bn2"])
    w2m = w_to_mat(params["w2"])
    use_proj = (stride != 1) or (Cin != Cout)
    if use_proj:
        ss, bs = fold_bn(*params["bns"])
        ws_mat = params["ws"][:, :, 0, 0].T                       # (Cin, Cout)
        xs = x_bf[:, ::stride, ::stride, :][:, :Ho, :Wo, :]       # (N, Ho, Wo, Cin)
        shortcut = ("proj", xs, ws_mat, ss, bs)
    else:
        shortcut = ("identity", x_bf)                             # (N, H, W, Cout)

    out = implicit_conv_stage(y1, w2m, s2, b2, k, apply_relu=True,
                              out_dtype=jnp.float32, shortcut=shortcut)
    return jnp.transpose(out, (0, 3, 1, 2))                       # back to NCHW


# ----------------------------------------------------------------------------
# Pure-JAX reference (correctness check)
# ----------------------------------------------------------------------------
def _conv_ref(x_nhwc, w_oihw, stride, pad):
    w = jnp.transpose(w_oihw, (2, 3, 1, 0))  # HWIO
    return jax.lax.conv_general_dilated(
        x_nhwc, w, (stride, stride), [(pad, pad), (pad, pad)],
        dimension_numbers=("NHWC", "HWIO", "NHWC"),
        precision=jax.lax.Precision.HIGHEST)


def _bn_ref(y, gamma, beta, mean, var):
    return (y - mean) / jnp.sqrt(var + BN_EPS) * gamma + beta


def basic_block_ref(x_nchw, params, k, stride):
    x = jnp.transpose(x_nchw, (0, 2, 3, 1)).astype(jnp.float32)
    Cin = x.shape[-1]
    Cout = params["w1"].shape[0]
    pad = k // 2
    y = jax.nn.relu(_bn_ref(_conv_ref(x, params["w1"], stride, pad), *params["bn1"]))
    y = _bn_ref(_conv_ref(y, params["w2"], 1, pad), *params["bn2"])
    if (stride != 1) or (Cin != Cout):
        sc = _bn_ref(_conv_ref(x, params["ws"], stride, 0), *params["bns"])
    else:
        sc = x
    out = jax.nn.relu(y + sc)
    return jnp.transpose(out, (0, 3, 1, 2))


# ----------------------------------------------------------------------------
# Deterministic parameter init + test
# ----------------------------------------------------------------------------
def init_params(key, in_channels, out_channels, k, stride):
    ks = jax.random.split(key, 16)

    def bn_params(k1, k2, k3, k4, c):
        gamma = 1.0 + 0.1 * jax.random.normal(k1, (c,), jnp.float32)
        beta = 0.1 * jax.random.normal(k2, (c,), jnp.float32)
        mean = 0.1 * jax.random.normal(k3, (c,), jnp.float32)
        var = 0.5 + jnp.abs(jax.random.normal(k4, (c,), jnp.float32)) * 0.5
        return (gamma, beta, mean, var)

    params = {
        "w1": 0.1 * jax.random.normal(ks[0], (out_channels, in_channels, k, k), jnp.float32),
        "w2": 0.1 * jax.random.normal(ks[1], (out_channels, out_channels, k, k), jnp.float32),
        "bn1": bn_params(ks[2], ks[3], ks[4], ks[5], out_channels),
        "bn2": bn_params(ks[6], ks[7], ks[8], ks[9], out_channels),
    }
    if stride != 1 or in_channels != out_channels:
        params["ws"] = 0.1 * jax.random.normal(
            ks[10], (out_channels, in_channels, 1, 1), jnp.float32)
        params["bns"] = bn_params(ks[11], ks[12], ks[13], ks[14], out_channels)
    return params


if __name__ == "__main__":
    def run_case(key, N, Cin, H, W, Cout, ksz, stride):
        kx, kp = jax.random.split(key)
        x = jax.random.normal(kx, (N, Cin, H, W), jnp.float32)
        params = init_params(kp, Cin, Cout, ksz, stride)
        out = jax.block_until_ready(basic_block_pallas(x, params, ksz, stride))
        ref = jax.block_until_ready(basic_block_ref(x, params, ksz, stride))
        # bf16 MXU operands with f32 accumulation -> slightly loose tolerance.
        np.testing.assert_allclose(np.asarray(out), np.asarray(ref),
                                   rtol=2e-2, atol=2e-2)

    key = jax.random.PRNGKey(0)
    k1, k2 = jax.random.split(key)
    # Projection-shortcut block (stride-2 downsample): im2col conv1 fallback +
    # implicit-GEMM conv2 with the 1x1 projection fused into its epilogue.
    run_case(k1, 2, 4, 16, 16, 8, 3, 2)
    # Identity-shortcut block (stride 1): implicit-GEMM conv1 and conv2 with the
    # bf16 identity residual fused into conv2.
    run_case(k2, 2, 8, 16, 16, 8, 3, 1)
    print("KERNEL_OK")
</pallas_src>

<mosaic_0001>
module attributes {stable_mosaic.version = 11 : i64} {
  func.func @kernel(%arg0: i32, %arg1: memref<128x36xbf16, #tpu.memory_space<vmem>>, %arg2: memref<36x128xbf16, #tpu.memory_space<vmem>>, %arg3: memref<1x128xf32, #tpu.memory_space<vmem>>, %arg4: memref<128x128xbf16, #tpu.memory_space<vmem>>) attributes {dimension_semantics = [#tpu.dimension_semantics<parallel>], iteration_bounds = array<i64: 1>, scalar_prefetch = 0 : i64, scratch_operands = 0 : i64, tpu.core_type = #tpu.core_type<tc>, window_params = [{transform_indices = @transform_0, window_bounds = array<i64: 128, 36>}, {pipeline_mode = #tpu.pipeline_mode<synchronous>, transform_indices = @transform_1, window_bounds = array<i64: 36, 128>}, {pipeline_mode = #tpu.pipeline_mode<synchronous>, transform_indices = @transform_2, window_bounds = array<i64: 1, 128>}, {transform_indices = @transform_3, window_bounds = array<i64: 128, 128>}]} {
    %c0 = arith.constant 0 : index
    %c0_0 = arith.constant 0 : index
    %0 = vector.load %arg1[%c0, %c0_0] : memref<128x36xbf16, #tpu.memory_space<vmem>>, vector<128x36xbf16>
    %c0_1 = arith.constant 0 : index
    %c0_2 = arith.constant 0 : index
    %1 = vector.load %arg2[%c0_1, %c0_2] : memref<36x128xbf16, #tpu.memory_space<vmem>>, vector<36x128xbf16>
    %cst = arith.constant dense<0.000000e+00> : vector<128x128xf32>
    %2 = tpu.matmul %0, %1, %cst {dimension_numbers = #tpu.dot_dimension_numbers<[1], [0], [0], [1], [0, 0, 1, 1], [], []>} : vector<128x36xbf16>, vector<36x128xbf16>, vector<128x128xf32> -> vector<128x128xf32>
    %c0_3 = arith.constant 0 : index
    %c0_4 = arith.constant 0 : index
    %3 = vector.load %arg3[%c0_3, %c0_4] : memref<1x128xf32, #tpu.memory_space<vmem>>, vector<1x128xf32>
    %4 = vector.broadcast %3 : vector<1x128xf32> to vector<128x128xf32>
    %5 = arith.addf %2, %4 : vector<128x128xf32>
    %cst_5 = arith.constant 0.000000e+00 : f32
    %6 = vector.broadcast %cst_5 : f32 to vector<128x128xf32>
    %7 = arith.maximumf %5, %6 : vector<128x128xf32>
    %8 = arith.truncf %7 : vector<128x128xf32> to vector<128x128xbf16>
    %c0_6 = arith.constant 0 : index
    %c0_7 = arith.constant 0 : index
    %9 = vector.load %arg4[%c0_6, %c0_7] : memref<128x128xbf16, #tpu.memory_space<vmem>>, vector<128x128xbf16>
    tpu.vector_store %arg4[%c0_6, %c0_7], %8 {strides = array<i32>} : memref<128x128xbf16, #tpu.memory_space<vmem>>, vector<128x128xbf16>,
    return
  }
  func.func @transform_0(%arg0: i32) -> (i32, i32) {
    %c0_i32 = arith.constant 0 : i32
    %c0_i32_0 = arith.constant 0 : i32
    return %arg0, %c0_i32 : i32, i32
  }
  func.func @transform_1(%arg0: i32) -> (i32, i32) {
    %c0_i32 = arith.constant 0 : i32
    %c0_i32_0 = arith.constant 0 : i32
    %c0_i32_1 = arith.constant 0 : i32
    return %c0_i32, %c0_i32_0 : i32, i32
  }
  func.func @transform_2(%arg0: i32) -> (i32, i32) {
    %c0_i32 = arith.constant 0 : i32
    %c0_i32_0 = arith.constant 0 : i32
    %c0_i32_1 = arith.constant 0 : i32
    return %c0_i32, %c0_i32_0 : i32, i32
  }
  func.func @transform_3(%arg0: i32) -> (i32, i32) {
    %c0_i32 = arith.constant 0 : i32
    %c0_i32_0 = arith.constant 0 : i32
    return %arg0, %c0_i32 : i32, i32
  }
}

</mosaic_0001>

<llo_original>
// kernel: tpu_custom_call.1
$region0: #{tpu_custom_call.1}
  #allocation0 [shape = 'u32[]', space=smem, size = 0x4, offset = 0x4, fixed_abs, tag = 'smem constant byte address 0x4 - core index']
  #allocation1 [shape = 'u32[144,128]{1,0:T(1,128)}', space=vmem, size = 0x12000, scoped, tag = 'internal scratch']
  %s0 = inlined_call_operand.vmem [shape: bf16[128,36], index: 0, kind: input, shape index: {}]
  %s1 = inlined_call_operand.vmem [shape: bf16[36,128], index: 1, kind: input, shape index: {}]
  %s2 = inlined_call_operand.vmem [shape: f32[1,128], index: 2, kind: input, shape index: {}]
  %s3 = inlined_call_operand.hbm [shape: bf16[128,128], index: 3, kind: output, shape index: {}]
  %s4 = sld [smem:[#allocation0]]
  $region22: #{tpu_custom_call.1} parent=0
    _
  %s6 = ssub.s32 1, %s4
  %s7 = scalar_select 0, %s6, %s4
  $region1: #{tpu_custom_call.1} parent=0
    #allocation2 [shape = 'u8[32768]{0}', space=vmem, size = 0x8000, scoped, tag = 'output window, operand 0, single buffered']
    #allocation3 [shape = 's32[1]{0}', space=sflag, size = 0x4, scoped, tag = 'scoped memory for tpu_custom_call.1']
    %8 = vsyncpa [#allocation3], 0
    // Predicated region
    $region2: #{tpu_custom_call.1} parent=1 // pred_check
      _
    $region3: #{tpu_custom_call.1} parent=1 // pred_check_branch
      %10 = sbr.rel (0) target = $region5
    $region4: #{tpu_custom_call.1} parent=1 // pred_region
      _
    $region5: #{tpu_custom_call.1} parent=1 // pred_fallthru
      _
    // Predicated region
    $region6: #{tpu_custom_call.1} parent=1 // pred_check
      _
    $region7: #{tpu_custom_call.1} parent=1 // pred_check_branch
      %12 = sbr.rel (0) target = $region9
    $region8: #{tpu_custom_call.1} parent=1 // pred_region
      _
    $region9: #{tpu_custom_call.1} parent=1 // pred_fallthru
      _
    // Predicated region
    $region10: #{tpu_custom_call.1} parent=1 // pred_check
      _
    $region11: #{tpu_custom_call.1} parent=1 // pred_check_branch
      %14 = sbr.rel (0) target = $region13
    $region12: #{tpu_custom_call.1} parent=1 // pred_region
      _
    $region13: #{tpu_custom_call.1} parent=1 // pred_fallthru
      _
    %v16 = vld [vmem:[%s0] sm:$0xf]
    %v17 = vld [vmem:[%s0 + $0x4] sm:$0xf]
    %v18 = vld [vmem:[%s0 + $0x8] sm:$0xf]
    %v19 = vld [vmem:[%s0 + $0xc] sm:$0xf]
    %v20 = vld [vmem:[%s0 + $0x10] sm:$0xf]
    %v21 = vld [vmem:[%s0 + $0x14] sm:$0xf]
    %v22 = vld [vmem:[%s0 + $0x18] sm:$0xf]
    %v23 = vld [vmem:[%s0 + $0x1c] sm:$0xf]
    %v24 = vld [vmem:[%s0 + $0x20] sm:$0xf]
    %v25 = vld [vmem:[%s0 + $0x24] sm:$0xf]
    %v26 = vld [vmem:[%s0 + $0x28] sm:$0xf]
    %v27 = vld [vmem:[%s0 + $0x2c] sm:$0xf]
    %v28 = vld [vmem:[%s0 + $0x30] sm:$0xf]
    %v29 = vld [vmem:[%s0 + $0x34] sm:$0xf]
    %v30 = vld [vmem:[%s0 + $0x38] sm:$0xf]
    %v31 = vld [vmem:[%s0 + $0x3c] sm:$0xf]
    %v32 = vld [vmem:[%s1] sm:$0xf]
    %v33 = vld [vmem:[%s1 + $0x4] sm:$0xf]
    %v34 = vld [vmem:[%s1 + $0x8] sm:$0xf]
    %v35 = vld [vmem:[%s1 + $0xc] sm:$0xf]
    %v36 = vld [vmem:[%s1 + $0x10] sm:$0x3]
    %v37 = vld [vmem:[%s2] sm:$0x1]
    %v39 = vlaneseq
    %v40 = vshrl.u32 %v39, 7
    %v41 = vsub.s32 0, %v40
    %v42 = vrot.slane %v37, %v41
    %v60 = vunpack.c.l.b16 %v16
    %v61 = vunpack.c.l.b16 %v17
    %v62 = vunpack.c.l.b16 %v18
    %v63 = vunpack.c.l.b16 %v19
    %v64 = vunpack.c.l.b16 %v20
    %v65 = vunpack.c.l.b16 %v21
    %v66 = vunpack.c.l.b16 %v22
    %v67 = vunpack.c.l.b16 %v23
    %v68 = vunpack.c.l.b16 %v24
    %v69 = vunpack.c.l.b16 %v25
    %v70 = vunpack.c.l.b16 %v26
    %v71 = vunpack.c.l.b16 %v27
    %v72 = vunpack.c.l.b16 %v28
    %v73 = vunpack.c.l.b16 %v29
    %v74 = vunpack.c.l.b16 %v30
    %v75 = vunpack.c.l.b16 %v31
    %v76 = vpack.c.b16 %v61, %v60
    %v77 = vpack.c.b16 %v63, %v62
    %v78 = vpack.c.b16 %v65, %v64
    %v79 = vpack.c.b16 %v67, %v66
    %v80 = vpack.c.b16 %v69, %v68
    %v81 = vpack.c.b16 %v71, %v70
    %v82 = vpack.c.b16 %v73, %v72
    %v83 = vpack.c.b16 %v75, %v74
    %v89 = vunpack.c.l.b16 %v32
    %v90 = vunpack.c.l.b16 %v33
    %v91 = vunpack.c.l.b16 %v34
    %v92 = vunpack.c.l.b16 %v35
    %v93 = vunpack.c.l.b16 %v36
    %v94 = vpack.c.b16 %v90, %v89
    %v95 = vpack.c.b16 %v92, %v91
    %v96 = vpack.c.b16 %v93, %v93
    %vm99 = vcmask 293888
    %v101 = vsel %vm99, %v76, 0
    %v104 = vsel %vm99, %v77, 0
    %v107 = vsel %vm99, %v78, 0
    %v110 = vsel %vm99, %v79, 0
    %v113 = vsel %vm99, %v80, 0
    %v116 = vsel %vm99, %v81, 0
    %v119 = vsel %vm99, %v82, 0
    %v122 = vsel %vm99, %v83, 0
    %vm124 = vcmask 1041408
    %v126 = vsel %vm124, %v96, 0
    %128 = vmatprep.subr.bf16.mxu0 0
    %129 = vmatpush1.bf16.msra.mxu0 %v94
    %130 = vmatprep.subr.bf16.mxu0 0
    %131 = vmatpush1.bf16.msra.mxu0 %v95
    %132 = vmatprep.subr.bf16.mxu0 0
    %133 = vmatpush1.bf16.msra.mxu0 %v126
    %134 = vmatprep.subr.bf16.mxu0 0
    %135 = vmatpush1.bf16.msra.mxu0 0
    %136 = vmatprep.subr.bf16.mxu0 0
    %137 = vmatpush1.bf16.msra.mxu0 0
    %138 = vmatprep.subr.bf16.mxu0 0
    %139 = vmatpush1.bf16.msra.mxu0 0
    %140 = vmatprep.subr.bf16.mxu0 0
    %141 = vmatpush1.bf16.msra.mxu0 0
    %142 = vmatprep.subr.bf16.mxu0 0
    %143 = vmatpush1.bf16.msra.mxu0 0
    %144 = vmatprep.subr.bf16.mxu0 0
    %145 = vmatpush1.bf16.msra.mxu0 0
    %146 = vmatprep.subr.bf16.mxu0 0
    %147 = vmatpush1.bf16.msra.mxu0 0
    %148 = vmatprep.subr.bf16.mxu0 0
    %149 = vmatpush1.bf16.msra.mxu0 0
    %150 = vmatprep.subr.bf16.mxu0 0
    %151 = vmatpush1.bf16.msra.mxu0 0
    %152 = vmatprep.subr.bf16.mxu0 0
    %153 = vmatpush1.bf16.msra.mxu0 0
    %154 = vmatprep.subr.bf16.mxu0 0
    %155 = vmatpush1.bf16.msra.mxu0 0
    %156 = vmatprep.subr.bf16.mxu0 0
    %157 = vmatpush1.bf16.msra.mxu0 0
    %158 = vmatprep.subr.bf16.mxu0 0
    %159 = vmatpush1.bf16.msra.mxu0 0
    %160 = vmatprep.mubr.bf16.mxu0 0
    %161 = vmatmul.mubr.bf16.gmra.mrb[0].mxu0 %v101
    %v162 = vpop.f32.mrb[0].mxu0
    %v163 = vadd.f32 %v42, %v162
    %v164 = vpop.f32.mrb[0].mxu0
    %v165 = vpop.f32.mrb[0].mxu0
    %v166 = vadd.f32 %v42, %v165
    %v167 = vpop.f32.mrb[0].mxu0
    %168 = vmatprep.mubr.bf16.mxu0 0
    %169 = vmatmul.mubr.bf16.gmra.mrb[0].mxu0 %v104
    %v170 = vpop.f32.mrb[0].mxu0
    %v171 = vadd.f32 %v42, %v170
    %v172 = vpop.f32.mrb[0].mxu0
    %v173 = vpop.f32.mrb[0].mxu0
    %v174 = vadd.f32 %v42, %v173
    %v175 = vpop.f32.mrb[0].mxu0
    %176 = vmatprep.mubr.bf16.mxu0 0
    %177 = vmatmul.mubr.bf16.gmra.mrb[0].mxu0 %v107
    %v178 = vpop.f32.mrb[0].mxu0
    %v179 = vadd.f32 %v42, %v178
    %v180 = vpop.f32.mrb[0].mxu0
    %v181 = vpop.f32.mrb[0].mxu0
    %v182 = vadd.f32 %v42, %v181
    %v183 = vpop.f32.mrb[0].mxu0
    %184 = vmatprep.mubr.bf16.mxu0 0
    %185 = vmatmul.mubr.bf16.gmra.mrb[0].mxu0 %v110
    %v186 = vpop.f32.mrb[0].mxu0
    %v187 = vadd.f32 %v42, %v186
    %v188 = vpop.f32.mrb[0].mxu0
    %v189 = vpop.f32.mrb[0].mxu0
    %v190 = vadd.f32 %v42, %v189
    %v191 = vpop.f32.mrb[0].mxu0
    %192 = vmatprep.mubr.bf16.mxu0 0
    %193 = vmatmul.mubr.bf16.gmra.mrb[0].mxu0 %v113
    %v194 = vpop.f32.mrb[0].mxu0
    %v195 = vadd.f32 %v42, %v194
    %v196 = vpop.f32.mrb[0].mxu0
    %v197 = vpop.f32.mrb[0].mxu0
    %v198 = vadd.f32 %v42, %v197
    %v199 = vpop.f32.mrb[0].mxu0
    %200 = vmatprep.mubr.bf16.mxu0 0
    %201 = vmatmul.mubr.bf16.gmra.mrb[0].mxu0 %v116
    %v202 = vpop.f32.mrb[0].mxu0
    %v203 = vadd.f32 %v42, %v202
    %v204 = vpop.f32.mrb[0].mxu0
    %v205 = vpop.f32.mrb[0].mxu0
    %v206 = vadd.f32 %v42, %v205
    %v207 = vpop.f32.mrb[0].mxu0
    %208 = vmatprep.mubr.bf16.mxu0 0
    %209 = vmatmul.mubr.bf16.gmra.mrb[0].mxu0 %v119
    %v210 = vpop.f32.mrb[0].mxu0
    %v211 = vadd.f32 %v42, %v210
    %v212 = vpop.f32.mrb[0].mxu0
    %v213 = vpop.f32.mrb[0].mxu0
    %v214 = vadd.f32 %v42, %v213
    %v215 = vpop.f32.mrb[0].mxu0
    %216 = vmatprep.mubr.bf16.mxu0 0
    %217 = vmatmul.mubr.bf16.gmra.mrb[0].mxu0 %v122
    %v218 = vpop.f32.mrb[0].mxu0
    %v219 = vadd.f32 %v42, %v218
    %v220 = vpop.f32.mrb[0].mxu0
    %v221 = vpop.f32.mrb[0].mxu0
    %v222 = vadd.f32 %v42, %v221
    %v223 = vpop.f32.mrb[0].mxu0
    %224 = vdwg.mxu0
    %v225 = vmax.f32 %v163, 0.0
    %v226 = vmax.f32 %v166, 0.0
    %v227 = vmax.f32 %v171, 0.0
    %v228 = vmax.f32 %v174, 0.0
    %v229 = vmax.f32 %v179, 0.0
    %v230 = vmax.f32 %v182, 0.0
    %v231 = vmax.f32 %v187, 0.0
    %v232 = vmax.f32 %v190, 0.0
    %v233 = vmax.f32 %v195, 0.0
    %v234 = vmax.f32 %v198, 0.0
    %v235 = vmax.f32 %v203, 0.0
    %v236 = vmax.f32 %v206, 0.0
    %v237 = vmax.f32 %v211, 0.0
    %v238 = vmax.f32 %v214, 0.0
    %v239 = vmax.f32 %v219, 0.0
    %v240 = vmax.f32 %v222, 0.0
    %v241 = vpack.c.bf16 %v226, %v225
    %v242 = vpack.c.bf16 %v228, %v227
    %v243 = vpack.c.bf16 %v230, %v229
    %v244 = vpack.c.bf16 %v232, %v231
    %v245 = vpack.c.bf16 %v234, %v233
    %v246 = vpack.c.bf16 %v236, %v235
    %v247 = vpack.c.bf16 %v238, %v237
    %v248 = vpack.c.bf16 %v240, %v239
    %v257 = vunpack.c.l.b16 %v241
    %v258 = vunpack.c.h.b16 %v241
    %v259 = vunpack.c.l.b16 %v242
    %v260 = vunpack.c.h.b16 %v242
    %v261 = vunpack.c.l.b16 %v243
    %v262 = vunpack.c.h.b16 %v243
    %v263 = vunpack.c.l.b16 %v244
    %v264 = vunpack.c.h.b16 %v244
    %v265 = vunpack.c.l.b16 %v245
    %v266 = vunpack.c.h.b16 %v245
    %v267 = vunpack.c.l.b16 %v246
    %v268 = vunpack.c.h.b16 %v246
    %v269 = vunpack.c.l.b16 %v247
    %v270 = vunpack.c.h.b16 %v247
    %v271 = vunpack.c.l.b16 %v248
    %v272 = vunpack.c.h.b16 %v248
    %v273 = vpack.c.b16 %v257, %v257
    %v274 = vpack.c.b16 %v258, %v258
    %v275 = vpack.c.b16 %v259, %v259
    %v276 = vpack.c.b16 %v260, %v260
    %v277 = vpack.c.b16 %v261, %v261
    %v278 = vpack.c.b16 %v262, %v262
    %v279 = vpack.c.b16 %v263, %v263
    %v280 = vpack.c.b16 %v264, %v264
    %v281 = vpack.c.b16 %v265, %v265
    %v282 = vpack.c.b16 %v266, %v266
    %v283 = vpack.c.b16 %v267, %v267
    %v284 = vpack.c.b16 %v268, %v268
    %v285 = vpack.c.b16 %v269, %v269
    %v286 = vpack.c.b16 %v270, %v270
    %v287 = vpack.c.b16 %v271, %v271
    %v288 = vpack.c.b16 %v272, %v272
    %305 = vst [vmem:[#allocation2] sm:$0xf] %v273
    %306 = vst [vmem:[#allocation2 + $0x4] sm:$0xf] %v274
    %307 = vst [vmem:[#allocation2 + $0x8] sm:$0xf] %v275
    %308 = vst [vmem:[#allocation2 + $0xc] sm:$0xf] %v276
    %309 = vst [vmem:[#allocation2 + $0x10] sm:$0xf] %v277
    %310 = vst [vmem:[#allocation2 + $0x14] sm:$0xf] %v278
    %311 = vst [vmem:[#allocation2 + $0x18] sm:$0xf] %v279
    %312 = vst [vmem:[#allocation2 + $0x1c] sm:$0xf] %v280
    %313 = vst [vmem:[#allocation2 + $0x20] sm:$0xf] %v281
    %314 = vst [vmem:[#allocation2 + $0x24] sm:$0xf] %v282
    %315 = vst [vmem:[#allocation2 + $0x28] sm:$0xf] %v283
    %316 = vst [vmem:[#allocation2 + $0x2c] sm:$0xf] %v284
    %317 = vst [vmem:[#allocation2 + $0x30] sm:$0xf] %v285
    %318 = vst [vmem:[#allocation2 + $0x34] sm:$0xf] %v286
    %319 = vst [vmem:[#allocation2 + $0x38] sm:$0xf] %v287
    %320 = vst [vmem:[#allocation2 + $0x3c] sm:$0xf] %v288
    // Predicated region
    $region14: #{tpu_custom_call.1} parent=1 // pred_check
      _
    $region15: #{tpu_custom_call.1} parent=1 // pred_check_branch
      %322 = sbr.rel (0) target = $region17
    $region16: #{tpu_custom_call.1} parent=1 // pred_region
      %s324 = ssub.s32 1024, 1024
      %325 = vsyncadd [#allocation3], %s324
      %s326 = sshll.u32 [#allocation2], 4
      %s327 = int_to_ptr.vmem [resolvable:$true] %s326
      %332 = dma.vmem_to_hbm [thread:$0]  %s327, 1024, %s3, [#allocation3], 64, 64, 4
    $region17: #{tpu_custom_call.1} parent=1 // pred_fallthru
      _
    // Predicated region
    $region18: #{tpu_custom_call.1} parent=1 // pred_check
      _
    $region19: #{tpu_custom_call.1} parent=1 // pred_check_branch
      %334 = sbr.rel (0) target = $region21
    $region20: #{tpu_custom_call.1} parent=1 // pred_region
      %335 = dma.done [#allocation3], 1024
    $region21: #{tpu_custom_call.1} parent=1 // pred_fallthru
      _
    %336 = vsyncpa [#allocation3], 1

</llo_original>
